<compile_context>
chip_gen: v7x
topology: tpu7x:2x2x1
jax: 0.10.0
libtpu: 0.0.40
codegen_flags: <defaults>
</compile_context>

<pallas_src>
import functools

import numpy as np

import jax
import jax.numpy as jnp
from jax.experimental import pallas as pl
from jax.experimental.pallas import tpu as pltpu

_CPAD = 128   # every channel dimension padded to one 128-lane vreg width
_EPS = 1e-5

# +1 if pltpu.roll matches jnp.roll (result[i] = x[i - shift]); set by probe.
_ROLL_SIGN = 1


# ---------------------------------------------------------------------------
# Tiny probe kernel: detect pltpu.roll's rotation convention once, eagerly.
# ---------------------------------------------------------------------------
def _roll_probe_kernel(x_ref, o_ref):
    o_ref[...] = pltpu.roll(x_ref[...], 1, axis=0)


def _detect_roll_convention():
    global _ROLL_SIGN
    x = jnp.arange(8 * 128, dtype=jnp.float32).reshape(8, 128)
    y = pl.pallas_call(
        _roll_probe_kernel,
        out_shape=jax.ShapeDtypeStruct((8, 128), jnp.float32))(x)
    _ROLL_SIGN = 1 if bool(jnp.allclose(y, jnp.roll(x, 1, axis=0))) else -1


# ---------------------------------------------------------------------------
# Pallas kernel: the whole ResNet-20 forward, b_img images per grid step.
# ---------------------------------------------------------------------------
def _resnet20_kernel(x_ref, w3_ref, b3_ref, wd_ref, bd_ref, s2_ref, s3_ref,
                     fcw_ref, fcb_ref, out_ref, *, h, w, b_img):
    f32 = jnp.float32
    bf16 = jnp.bfloat16
    hw1, hw2, hw3 = h * w, (h * w) // 4, (h * w) // 16

    def tap_plan(hh, ww):
        """(roll_shift, boundary_mask) for the 9 taps of a 3x3/pad-1 conv."""
        hw = hh * ww
        m = b_img * hw
        pos = jax.lax.broadcasted_iota(jnp.int32, (m, _CPAD), 0)
        loc = jnp.bitwise_and(pos, hw - 1)          # position within one image
        col = jnp.bitwise_and(pos, ww - 1)          # column within one row
        row_ok = [loc >= ww, None, loc < (hh - 1) * ww]
        col_ok = [col >= 1, None, col < (ww - 1)]
        plan = []
        for kh in range(3):
            for kw in range(3):
                d = (kh - 1) * ww + (kw - 1)        # tap t reads a[p + d]
                shift = (_ROLL_SIGN * -d) % m
                rm, cm = row_ok[kh], col_ok[kw]
                if rm is None:
                    mask = cm
                elif cm is None:
                    mask = rm
                else:
                    mask = jnp.logical_and(rm, cm)
                plan.append((shift, mask))
        return plan

    def conv3x3(a, layer, plan):
        """3x3 conv: 8 XLU rolls + masks, one concat-K (M,1152)@(1152,128) dot."""
        taps = []
        for shift, mask in plan:
            r = a if shift == 0 else pltpu.roll(a, shift, axis=0)
            if mask is not None:
                r = jnp.where(mask, r, 0.0)
            taps.append(r.astype(bf16))
        a9 = jnp.concatenate(taps, axis=-1)                      # (M, 1152) bf16
        return jnp.dot(a9, w3_ref[layer], preferred_element_type=f32)

    def basic_block(a, layer, plan):
        y = jnp.maximum(conv3x3(a, layer, plan) + b3_ref[layer], 0.0)
        y = conv3x3(y, layer + 1, plan) + b3_ref[layer + 1] + a
        return jnp.maximum(y, 0.0)

    def subsample(y, s_ref, hw_in):
        """Per-image 2x stride subsample as an exact 0/1 selection matmul."""
        s = s_ref[...]
        parts = [jnp.dot(s, y[i * hw_in:(i + 1) * hw_in, :],
                         preferred_element_type=f32) for i in range(b_img)]
        return parts[0] if b_img == 1 else jnp.concatenate(parts, axis=0)

    a = x_ref[...].astype(f32)                                   # (b_img*hw1, 128)

    # stem: conv1 + bn1 + relu (layer 0 of the stacked weights)
    plan1 = tap_plan(h, w)
    a = jnp.maximum(conv3x3(a, 0, plan1) + b3_ref[0], 0.0)
    nl = 1

    # stage 1: width 16, stride 1, identity shortcuts
    for _ in range(3):
        a = basic_block(a, nl, plan1)
        nl += 2

    # stage 2: width 32, first block downsamples 2x
    plan2 = tap_plan(h // 2, w // 2)
    sc = jnp.dot(subsample(a, s2_ref, hw1).astype(bf16), wd_ref[0],
                 preferred_element_type=f32) + bd_ref[0]
    y = subsample(conv3x3(a, nl, plan1), s2_ref, hw1)            # stride-2 conv
    y = jnp.maximum(y + b3_ref[nl], 0.0)
    nl += 1
    y = conv3x3(y, nl, plan2) + b3_ref[nl] + sc
    nl += 1
    a = jnp.maximum(y, 0.0)
    for _ in range(2):
        a = basic_block(a, nl, plan2)
        nl += 2

    # stage 3: width 64, first block downsamples 2x
    plan3 = tap_plan(h // 4, w // 4)
    sc = jnp.dot(subsample(a, s3_ref, hw2).astype(bf16), wd_ref[1],
                 preferred_element_type=f32) + bd_ref[1]
    y = subsample(conv3x3(a, nl, plan2), s3_ref, hw2)            # stride-2 conv
    y = jnp.maximum(y + b3_ref[nl], 0.0)
    nl += 1
    y = conv3x3(y, nl, plan3) + b3_ref[nl] + sc
    nl += 1
    a = jnp.maximum(y, 0.0)
    for _ in range(2):
        a = basic_block(a, nl, plan3)
        nl += 2

    # global average pool (per image) + FC, lane-dense 128-wide output
    feats = [jnp.sum(a[i * hw3:(i + 1) * hw3, :], axis=0, keepdims=True)
             * (1.0 / hw3) for i in range(b_img)]
    feat = feats[0] if b_img == 1 else jnp.concatenate(feats, axis=0)
    out_ref[0] = (jnp.dot(feat, fcw_ref[...], preferred_element_type=f32)
                  + fcb_ref[...])


# ---------------------------------------------------------------------------
# Host-side packing helpers (plain JAX / numpy, one-time per call)
# ---------------------------------------------------------------------------
def _bn_affine(bn):
    gamma, beta, mean, var = bn
    scale = gamma * jax.lax.rsqrt(var + _EPS)
    shift = beta - mean * scale
    return scale, shift


def _pack_conv3x3(wconv, bn):
    """Fold BN into a 3x3 conv; pad channels to 128; tap-major (1152,128) rows."""
    scale, shift = _bn_affine(bn)
    kh, kw, ci, co = wconv.shape
    wf = (wconv * scale[None, None, None, :]).reshape(kh * kw, ci, co)
    wp = jnp.zeros((9, _CPAD, _CPAD), jnp.float32).at[:, :ci, :co].set(wf)
    wp = wp.reshape(9 * _CPAD, _CPAD).astype(jnp.bfloat16)
    bp = jnp.zeros((1, _CPAD), jnp.float32).at[0, :co].set(shift)
    return wp, bp


def _pack_conv1x1(wconv, bn):
    scale, shift = _bn_affine(bn)
    ci, co = wconv.shape[2], wconv.shape[3]
    wf = wconv.reshape(ci, co) * scale[None, :]
    wp = jnp.zeros((_CPAD, _CPAD), jnp.float32).at[:ci, :co].set(wf)
    bp = jnp.zeros((1, _CPAD), jnp.float32).at[0, :co].set(shift)
    return wp.astype(jnp.bfloat16), bp


def _subsample_matrix(h, w):
    """S[out, in] = 1 selecting the even-row / even-col positions (stride 2)."""
    ho, wo = h // 2, w // 2
    s = np.zeros((ho * wo, h * w), np.float32)
    for oh in range(ho):
        for ow in range(wo):
            s[oh * wo + ow, (2 * oh) * w + 2 * ow] = 1.0
    return s


def _const_spec(arr):
    """Full-array VMEM-resident block (same block for every grid step)."""
    nd = arr.ndim
    return pl.BlockSpec(arr.shape, lambda i, _nd=nd: (0,) * _nd)


def _vmem_limit_bytes():
    try:
        cap = int(pltpu.get_tpu_info().vmem_capacity_bytes)
        return min((cap * 3) // 4, 96 * 1024 * 1024)
    except Exception:
        return 48 * 1024 * 1024


def _forward_pallas(x_nhwc, params):
    n, h, w, c = x_nhwc.shape
    assert c == 3, "stem conv expects 3 input channels"
    assert h % 4 == 0 and w % 4 == 0 and h >= 8 and w >= 8
    assert (h & (h - 1)) == 0 and (w & (w - 1)) == 0, \
        "spatial dims must be powers of two (boundary masks use bitwise math)"
    hw1, hw2, hw3 = h * w, (h * w) // 4, (h * w) // 16
    assert hw3 % 8 == 0, "stage-3 spatial extent must stay sublane aligned"
    num_classes = params["fc_b"].shape[0]
    ncp = ((num_classes + _CPAD - 1) // _CPAD) * _CPAD

    # Pack several images into one grid step (bigger matmul M) while keeping
    # >= 2 grid steps so v7x can still split the batch across its TensorCores.
    b_img = 1
    for cand in (4, 2):
        if n % cand == 0 and n // cand >= 2:
            b_img = cand
            break
    n_steps = n // b_img

    # --- fold BN into weights, pad channels to 128, stack (stem = layer 0) ---
    w3_list, b3_list, wd_list, bd_list = [], [], [], []
    wp, bp = _pack_conv3x3(params["conv1_w"], params["bn1"])
    w3_list.append(wp); b3_list.append(bp)
    for blocks in params["layers"]:
        for blk in blocks:
            wp, bp = _pack_conv3x3(blk["conv1_w"], blk["bn1"])
            w3_list.append(wp); b3_list.append(bp)
            wp, bp = _pack_conv3x3(blk["conv2_w"], blk["bn2"])
            w3_list.append(wp); b3_list.append(bp)
            if "down_w" in blk:
                wdp, bdp = _pack_conv1x1(blk["down_w"], blk["down_bn"])
                wd_list.append(wdp); bd_list.append(bdp)
    w3 = jnp.stack(w3_list)            # (19, 1152, 128) bf16
    b3 = jnp.stack(b3_list)            # (19, 1, 128)    f32
    wd = jnp.stack(wd_list)            # (2, 128, 128)   bf16
    bd = jnp.stack(bd_list)            # (2, 1, 128)     f32

    fcw = jnp.zeros((_CPAD, ncp), jnp.float32)
    fcw = fcw.at[:params["fc_w"].shape[0], :num_classes].set(params["fc_w"])
    fcb = jnp.zeros((1, ncp), jnp.float32).at[0, :num_classes].set(params["fc_b"])

    # Small exact 0/1 selection matrices for the two stride-2 transitions.
    s2 = jnp.asarray(_subsample_matrix(h, w), jnp.float32)            # (hw2, hw1)
    s3 = jnp.asarray(_subsample_matrix(h // 2, w // 2), jnp.float32)  # (hw3, hw2)

    # Input streamed as bf16 (halves per-image HBM traffic vs the f32 version).
    xp = jnp.pad(x_nhwc.reshape(n * hw1, c), ((0, 0), (0, _CPAD - c)))
    xp = xp.astype(jnp.bfloat16)

    inputs = [xp, w3, b3, wd, bd, s2, s3, fcw, fcb]
    in_specs = [pl.BlockSpec((b_img * hw1, _CPAD), lambda i: (i, 0))]
    in_specs += [_const_spec(a) for a in inputs[1:]]

    m1, m2, m3 = b_img * hw1, b_img * hw2, b_img * hw3
    macs = ((8 * m1 + 6 * m2 + 5 * m3) * 9 * _CPAD * _CPAD   # concat-K convs
            + 2 * b_img * (hw2 * hw1 + hw3 * hw2) * _CPAD    # subsample matmuls
            + (m2 + m3) * _CPAD * _CPAD                      # 1x1 shortcut projs
            + b_img * _CPAD * ncp)                           # FC
    bytes_acc = (sum(int(a.size) * a.dtype.itemsize for a in inputs)
                 + n * ncp * 4)

    out = pl.pallas_call(
        functools.partial(_resnet20_kernel, h=h, w=w, b_img=b_img),
        out_shape=jax.ShapeDtypeStruct((n_steps, b_img, ncp), jnp.float32),
        grid=(n_steps,),
        in_specs=in_specs,
        out_specs=pl.BlockSpec((1, b_img, ncp), lambda i: (i, 0, 0)),
        compiler_params=pltpu.CompilerParams(
            dimension_semantics=("parallel",),       # megacore: steps across TCs
            vmem_limit_bytes=_vmem_limit_bytes()),
        cost_estimate=pl.CostEstimate(
            flops=int(2 * macs * n_steps),
            transcendentals=0,
            bytes_accessed=int(bytes_acc)),
    )(*inputs)
    return out.reshape(n, ncp)[:, :num_classes]


# ---------------------------------------------------------------------------
# Pure-JAX reference (lax.conv) with matching bf16 operand rounding
# ---------------------------------------------------------------------------
def _conv_bn_ref(x, w, bn, stride, padding, relu=True, residual=None):
    scale, shift = _bn_affine(bn)
    wf = (w * scale[None, None, None, :]).astype(jnp.bfloat16)
    y = jax.lax.conv_general_dilated(
        x.astype(jnp.bfloat16), wf, (stride, stride),
        [(padding, padding), (padding, padding)],
        dimension_numbers=("NHWC", "HWIO", "NHWC"),
        preferred_element_type=jnp.float32)
    y = y + shift
    if residual is not None:
        y = y + residual
    if relu:
        y = jnp.maximum(y, 0.0)
    return y


def _forward_reference(x_nhwc, params):
    y = _conv_bn_ref(x_nhwc, params["conv1_w"], params["bn1"], 1, 1, relu=True)
    for si, blocks in enumerate(params["layers"]):
        for bi, blk in enumerate(blocks):
            stride = 2 if (si > 0 and bi == 0) else 1
            out = _conv_bn_ref(y, blk["conv1_w"], blk["bn1"], stride, 1, relu=True)
            if "down_w" in blk:
                sc = _conv_bn_ref(y, blk["down_w"], blk["down_bn"], stride, 0,
                                  relu=False)
            else:
                sc = y
            y = _conv_bn_ref(out, blk["conv2_w"], blk["bn2"], 1, 1, relu=True,
                             residual=sc)
    feat = jnp.mean(y, axis=(1, 2))
    return feat @ params["fc_w"] + params["fc_b"]


# ---------------------------------------------------------------------------
# Top-level forward (matches Resnet20Model.forward semantics)
# ---------------------------------------------------------------------------
def resnet20_forward(x_nchw, params, use_pallas=True):
    # PyTorch module semantics: channels < 3 -> concatenate three copies.
    if x_nchw.shape[1] < 3:
        x_nchw = jnp.concatenate([x_nchw, x_nchw, x_nchw], axis=1)
    x = jnp.transpose(x_nchw, (0, 2, 3, 1))          # NCHW -> NHWC
    if use_pallas:
        return _forward_pallas(x, params)
    return _forward_reference(x, params)


# ---------------------------------------------------------------------------
# Deterministic synthetic parameter initialization (ResNet-20 topology)
# ---------------------------------------------------------------------------
def _init_conv(key, kh, kw, cin, cout):
    fan_in = kh * kw * cin
    return jax.random.normal(key, (kh, kw, cin, cout), jnp.float32) / jnp.sqrt(fan_in)


def _init_bn(key, c):
    k1, k2, k3, k4 = jax.random.split(key, 4)
    gamma = 1.0 + 0.1 * jax.random.normal(k1, (c,), jnp.float32)
    beta = 0.1 * jax.random.normal(k2, (c,), jnp.float32)
    mean = 0.1 * jax.random.normal(k3, (c,), jnp.float32)
    var = 1.0 + 0.1 * jax.random.uniform(k4, (c,), jnp.float32)
    return (gamma, beta, mean, var)


def init_resnet20_params(key, num_classes):
    keys = iter(jax.random.split(key, 128))
    params = {
        "conv1_w": _init_conv(next(keys), 3, 3, 3, 16),
        "bn1": _init_bn(next(keys), 16),
    }
    widths = [16, 32, 64]
    in_c = 16
    layers = []
    for si, width in enumerate(widths):
        blocks = []
        for bi in range(3):
            stride = 2 if (si > 0 and bi == 0) else 1
            bp = {
                "conv1_w": _init_conv(next(keys), 3, 3, in_c, width),
                "bn1": _init_bn(next(keys), width),
                "conv2_w": _init_conv(next(keys), 3, 3, width, width),
                "bn2": _init_bn(next(keys), width),
            }
            if stride != 1 or in_c != width:
                bp["down_w"] = _init_conv(next(keys), 1, 1, in_c, width)
                bp["down_bn"] = _init_bn(next(keys), width)
            blocks.append(bp)
            in_c = width
        layers.append(blocks)
    params["layers"] = layers
    params["fc_w"] = jax.random.normal(next(keys), (64, num_classes),
                                       jnp.float32) / jnp.sqrt(64.0)
    params["fc_b"] = 0.1 * jax.random.normal(next(keys), (num_classes,), jnp.float32)
    return params
    # TODO(synk): pretrained torch.hub weights and freeze/trainable-layer
    # bookkeeping are training/checkpoint concerns with no forward-pass effect.


# ---------------------------------------------------------------------------
if __name__ == "__main__":
    _detect_roll_convention()            # probe pltpu.roll's sign once, eagerly

    key = jax.random.PRNGKey(0)
    pkey, xkey = jax.random.split(key)

    num_classes = 10
    params = init_resnet20_params(pkey, num_classes)

    # Small NCHW input: batch 4 exercises multi-image grid steps (b_img=2,
    # grid=2) and channels=1 exercises the channel-tripling branch.
    x = jax.random.normal(xkey, (4, 1, 16, 16), jnp.float32)

    fwd = jax.jit(functools.partial(resnet20_forward, use_pallas=True))
    logits = fwd(x, params)
    jax.block_until_ready(logits)
    assert logits.shape == (4, num_classes), logits.shape

    # Cross-check against a pure-JAX (lax.conv) reference with matching bf16
    # operand rounding.
    ref_fwd = jax.jit(functools.partial(resnet20_forward, use_pallas=False))
    ref = ref_fwd(x, params)
    jax.block_until_ready(ref)
    if not jnp.allclose(logits, ref, rtol=3e-2, atol=3e-2):
        max_err = float(jnp.max(jnp.abs(logits - ref)))
        raise AssertionError(f"Pallas output mismatch vs reference, max|d|={max_err}")

    print("KERNEL_OK")
</pallas_src>

<mosaic_0001>
module attributes {stable_mosaic.version = 11 : i64} {
  func.func @_roll_probe_kernel(%arg0: memref<8x128xf32, #tpu.memory_space<vmem>>, %arg1: memref<8x128xf32, #tpu.memory_space<vmem>>) attributes {dimension_semantics = [], scalar_prefetch = 0 : i64, scratch_operands = 0 : i64, tpu.core_type = #tpu.core_type<tc>} {
    %c0 = arith.constant 0 : index
    %c0_0 = arith.constant 0 : index
    %0 = vector.load %arg0[%c0, %c0_0] : memref<8x128xf32, #tpu.memory_space<vmem>>, vector<8x128xf32>
    %c1_i32 = arith.constant 1 : i32
    %1 = tpu.dynamic_rotate %0 by %c1_i32 dim 0 : vector<8x128xf32>, i32 -> vector<8x128xf32>
    %c0_1 = arith.constant 0 : index
    %c0_2 = arith.constant 0 : index
    %2 = vector.load %arg1[%c0_1, %c0_2] : memref<8x128xf32, #tpu.memory_space<vmem>>, vector<8x128xf32>
    tpu.vector_store %arg1[%c0_1, %c0_2], %1 {strides = array<i32>} : memref<8x128xf32, #tpu.memory_space<vmem>>, vector<8x128xf32>,
    return
  }
}

</mosaic_0001>

<llo_original>
// kernel: tpu_custom_call.1
$region0: #{tpu_custom_call.1}
  #allocation0 [shape = 'u32[]', space=smem, size = 0x4, offset = 0x4, fixed_abs, tag = 'smem constant byte address 0x4 - core index']
  #allocation1 [shape = 'u32[144,128]{1,0:T(1,128)}', space=vmem, size = 0x12000, scoped, tag = 'internal scratch']
  %s0 = inlined_call_operand.hbm [shape: f32[8,128], index: 0, kind: input, shape index: {}]
  %s1 = inlined_call_operand.hbm [shape: f32[8,128], index: 1, kind: output, shape index: {}]
  %s2 = sld [smem:[#allocation0]]
  $region18: #{tpu_custom_call.1} parent=0
    _
  %s4 = ssub.s32 1, %s2
  %s5 = scalar_select 0, %s4, %s2
  $region1: #{tpu_custom_call.1} parent=0
    #allocation2 [shape = 'u8[4096]{0}', space=vmem, size = 0x1000, scoped, tag = 'input window, operand 0, single buffered']
    #allocation3 [shape = 's32[1]{0}', space=sflag, size = 0x4, scoped, tag = 'scoped memory for tpu_custom_call.1']
    #allocation4 [shape = 's32[1]{0}', space=sflag, size = 0x4, scoped, tag = 'scoped memory for tpu_custom_call.1']
    #allocation5 [shape = 'u8[4096]{0}', space=vmem, size = 0x1000, scoped, tag = 'output window, operand 0, single buffered']
    %6 = vsyncpa [#allocation3], 0
    %7 = vsyncpa [#allocation4], 0
    // Predicated region
    $region2: #{tpu_custom_call.1} parent=1 // pred_check
      _
    $region3: #{tpu_custom_call.1} parent=1 // pred_check_branch
      %9 = sbr.rel (0) target = $region5
    $region4: #{tpu_custom_call.1} parent=1 // pred_region
      %s11 = ssub.s32 128, 128
      %12 = vsyncadd [#allocation3], %s11
      %s14 = sshll.u32 [#allocation2], 4
      %s15 = int_to_ptr.vmem [resolvable:$true] %s14
      %17 = dma.hbm_to_vmem [thread:$0]  %s0, 128, %s15, [#allocation3]
    $region5: #{tpu_custom_call.1} parent=1 // pred_fallthru
      _
    // Predicated region
    $region6: #{tpu_custom_call.1} parent=1 // pred_check
      _
    $region7: #{tpu_custom_call.1} parent=1 // pred_check_branch
      %19 = sbr.rel (0) target = $region9
    $region8: #{tpu_custom_call.1} parent=1 // pred_region
      %20 = dma.done [#allocation3], 128
    $region9: #{tpu_custom_call.1} parent=1 // pred_fallthru
      _
    %v21 = vld [vmem:[#allocation2] sm:$0xff]
    %v22 = vrot.slane %v21, 7
    %23 = vst [vmem:[#allocation5] sm:$0xff] %v22
    // Predicated region
    $region10: #{tpu_custom_call.1} parent=1 // pred_check
      _
    $region11: #{tpu_custom_call.1} parent=1 // pred_check_branch
      %25 = sbr.rel (0) target = $region13
    $region12: #{tpu_custom_call.1} parent=1 // pred_region
      %s27 = ssub.s32 128, 128
      %28 = vsyncadd [#allocation4], %s27
      %s30 = sshll.u32 [#allocation5], 4
      %s31 = int_to_ptr.vmem [resolvable:$true] %s30
      %33 = dma.vmem_to_hbm [thread:$0]  %s31, 128, %s1, [#allocation4]
    $region13: #{tpu_custom_call.1} parent=1 // pred_fallthru
      _
    // Predicated region
    $region14: #{tpu_custom_call.1} parent=1 // pred_check
      _
    $region15: #{tpu_custom_call.1} parent=1 // pred_check_branch
      %35 = sbr.rel (0) target = $region17
    $region16: #{tpu_custom_call.1} parent=1 // pred_region
      %36 = dma.done [#allocation4], 128
    $region17: #{tpu_custom_call.1} parent=1 // pred_fallthru
      _
    %37 = vsyncpa [#allocation3], 1
    %38 = vsyncpa [#allocation4], 1

</llo_original>
